<compile_context>
chip_gen: v6e
topology: v6e:2x2x1
jax: 0.10.0
libtpu: 0.0.40
codegen_flags: <defaults>
</compile_context>

<pallas_src>
import jax
import jax.numpy as jnp
from jax import lax
from jax.experimental import pallas as pl
from jax.experimental.pallas import tpu as pltpu


def _round_up(x, m):
    return ((x + m - 1) // m) * m


def gru_kernel(x_ref, wih_ref, whh_ref, bg_ref, bhn_ref, out_ref, gi_scr, h_scr):
    # x_ref:   (T, Bc, D)   time-major input chunk
    # wih_ref: (D, 3H)      fused input weights, gate order [r | z | n]
    # whh_ref: (H, 3H)      fused hidden weights, gate order [r | z | n]
    # bg_ref:  (1, 3H)      combined biases [b_ir+b_hr | b_iz+b_hz | b_in] (f32)
    # bhn_ref: (1, H)       hidden-side n-gate bias (f32)
    # out_ref: (T, Bc, H)   per-timestep hidden states for this chunk
    # gi_scr:  (T, Bc, 3H)  f32 scratch: input-side gate pre-activations
    # h_scr:   (Bc, H)      f32 scratch: hidden-state carry across seq chunks
    T, Bc, D = x_ref.shape
    H = whh_ref.shape[0]

    # New sequence starts at the first seq-chunk of every batch chunk: zero carry.
    @pl.when(pl.program_id(1) == 0)
    def _():
        h_scr[...] = jnp.zeros_like(h_scr)

    wih = wih_ref[...]
    whh = whh_ref[...]
    bg = bg_ref[...]                                    # (1, 3H)
    # Hoist the bhn broadcast out of the (unrolled) step loop.
    bhn_b = jnp.broadcast_to(bhn_ref[...], (Bc, H))     # (Bc, H)

    # ---- Phase 1: ONE fused matmul for the whole chunk's input projection. ----
    # Bc is a multiple of 8 (sublane tile), so the (T,Bc,D)->(T*Bc,D) reshape is
    # tile-aligned (free). M = T*Bc gives proper MXU fill; single scratch store.
    x2d = x_ref[...].reshape(T * Bc, D).astype(wih.dtype)
    gi_scr[...] = (
        jnp.dot(x2d, wih, preferred_element_type=jnp.float32) + bg
    ).reshape(T, Bc, 3 * H)

    # ---- Phase 2: recurrence. Only (Bc,H)@(H,3H) is on the critical path. ----
    def step(t, h):
        gi = gi_scr[t]                                                # (Bc, 3H)
        gh = jnp.dot(h.astype(whh.dtype), whh,
                     preferred_element_type=jnp.float32)              # (Bc, 3H)
        # TODO(synk): for H < 128 these gate slices fall mid-vreg; a lane-aligned
        # gate-padded layout would remove the cross-lane extracts.
        r = jax.nn.sigmoid(gi[:, 0:H] + gh[:, 0:H])
        z = jax.nn.sigmoid(gi[:, H:2 * H] + gh[:, H:2 * H])
        n = jnp.tanh(gi[:, 2 * H:] + r * (gh[:, 2 * H:] + bhn_b))
        h_new = (1.0 - z) * n + z * h                                 # (Bc, H)
        out_ref[t] = h_new.astype(out_ref.dtype)
        return h_new

    # Bounded unroll: LLO scheduling visibility without vreg-spill / I-mem blowup.
    h_scr[...] = lax.fori_loop(0, T, step, h_scr[...], unroll=min(T, 8))


def encoder_forward(enc_input, w_ih, w_hh, b_ih, b_hh, *,
                    seq_chunk=32, batch_chunk=8, matmul_dtype=jnp.float32):
    """enc_input: (batch, seq, input_dim) float32.
    Weights in PyTorch nn.GRU layout (gate order [r, z, n] along the 3H axis):
      w_ih: (3H, D), w_hh: (3H, H), b_ih: (3H,), b_hh: (3H,)
    Returns (output, hidden): (seq, batch, H) time-major and (1, batch, H)."""
    B, S, D = enc_input.shape
    H = w_hh.shape[1]

    # time-major, matching enc_input.permute(1, 0, 2)
    x_tm = jnp.transpose(enc_input, (1, 0, 2)).astype(jnp.float32)    # (S, B, D)

    # Batch padded to the 8-sublane boundary; sequence chunked through the grid
    # so DMA/compute overlap and VMEM stays bounded on v7x/v5e scoped limits.
    Bc = _round_up(max(1, min(batch_chunk, B)), 8)
    B_pad = _round_up(B, Bc)
    T = max(1, min(seq_chunk, S))
    S_pad = _round_up(S, T)
    x_pad = jnp.pad(x_tm, ((0, S_pad - S), (0, B_pad - B), (0, 0)))

    # Fused, transposed weights (columns ordered [r | z | n]); bf16 operands on
    # v6e/v7x shorten the per-step MXU op (elementwise math / h carry stay f32).
    wih_cat = w_ih.T.astype(matmul_dtype)                             # (D, 3H)
    whh_cat = w_hh.T.astype(matmul_dtype)                             # (H, 3H)

    bi = b_ih.reshape(3, H).astype(jnp.float32)
    bh = b_hh.reshape(3, H).astype(jnp.float32)
    # Fold hidden biases for r and z into the input-side bias; n's hidden bias
    # stays separate because r multiplies (W_hn h + b_hn).
    bg = jnp.concatenate([bi[0] + bh[0], bi[1] + bh[1], bi[2]]).reshape(1, 3 * H)
    bhn = bh[2].reshape(1, H)

    nb = B_pad // Bc
    ns = S_pad // T
    out_pad = pl.pallas_call(
        gru_kernel,
        out_shape=jax.ShapeDtypeStruct((S_pad, B_pad, H), jnp.float32),
        grid_spec=pltpu.PrefetchScalarGridSpec(
            num_scalar_prefetch=0,
            grid=(nb, ns),                      # (batch chunks, seq chunks)
            in_specs=[
                pl.BlockSpec((T, Bc, D), lambda b, s: (s, b, 0)),     # x chunk
                pl.BlockSpec((D, 3 * H), lambda b, s: (0, 0)),        # w_ih fused
                pl.BlockSpec((H, 3 * H), lambda b, s: (0, 0)),        # w_hh fused
                pl.BlockSpec((1, 3 * H), lambda b, s: (0, 0)),        # combined bias
                pl.BlockSpec((1, H), lambda b, s: (0, 0)),            # b_hn
            ],
            out_specs=pl.BlockSpec((T, Bc, H), lambda b, s: (s, b, 0)),
            scratch_shapes=[
                pltpu.VMEM((T, Bc, 3 * H), jnp.float32),   # gi for one chunk
                pltpu.VMEM((Bc, H), jnp.float32),          # hidden-state carry
            ],
        ),
        compiler_params=pltpu.CompilerParams(
            # Batch chunks are independent -> 'parallel' (2 TCs on v7x);
            # the recurrent sequence axis must stay 'arbitrary'.
            dimension_semantics=("parallel", "arbitrary"),
            vmem_limit_bytes=32 * 1024 * 1024,
        ),
    )(x_pad, wih_cat, whh_cat, bg, bhn)

    output = out_pad[:S, :B]          # drop seq / batch padding
    hidden = output[-1:]              # (1, B, H) final hidden state
    return output, hidden


def gru_reference(enc_input, w_ih, w_hh, b_ih, b_hh):
    """Pure-JAX reference reproducing torch.nn.GRU semantics."""
    B, S, D = enc_input.shape
    H = w_hh.shape[1]
    x_tm = jnp.transpose(enc_input, (1, 0, 2))
    wir, wiz, win = jnp.split(w_ih, 3, axis=0)
    whr, whz, whn = jnp.split(w_hh, 3, axis=0)
    bir, biz, bin_ = jnp.split(b_ih, 3)
    bhr, bhz, bhn = jnp.split(b_hh, 3)

    def step(h, x_t):
        r = jax.nn.sigmoid(x_t @ wir.T + bir + h @ whr.T + bhr)
        z = jax.nn.sigmoid(x_t @ wiz.T + biz + h @ whz.T + bhz)
        n = jnp.tanh(x_t @ win.T + bin_ + r * (h @ whn.T + bhn))
        h_new = (1.0 - z) * n + z * h
        return h_new, h_new

    h0 = jnp.zeros((B, H), jnp.float32)
    h_last, outs = jax.lax.scan(step, h0, x_tm)
    return outs, h_last[None]


if __name__ == "__main__":
    # Small shapes consistent with the module's forward:
    # enc_input (batch, seq, input_dim); enc_units = hidden size.
    batch, seq, input_dim, enc_units = 2, 8, 32, 32

    key = jax.random.PRNGKey(0)
    k_x, k_wih, k_whh, k_bih, k_bhh = jax.random.split(key, 5)

    scale = 1.0 / jnp.sqrt(enc_units)  # PyTorch nn.GRU uniform(-1/sqrt(H), 1/sqrt(H))
    enc_input = jax.random.normal(k_x, (batch, seq, input_dim), jnp.float32)
    w_ih = jax.random.uniform(k_wih, (3 * enc_units, input_dim), jnp.float32, -scale, scale)
    w_hh = jax.random.uniform(k_whh, (3 * enc_units, enc_units), jnp.float32, -scale, scale)
    b_ih = jax.random.uniform(k_bih, (3 * enc_units,), jnp.float32, -scale, scale)
    b_hh = jax.random.uniform(k_bhh, (3 * enc_units,), jnp.float32, -scale, scale)

    ref_out, ref_hid = gru_reference(enc_input, w_ih, w_hh, b_ih, b_hh)

    # f32 MXU operands (bit-faithful to torch.nn.GRU); seq_chunk=4 exercises the
    # cross-chunk hidden-state carry (grid = (1, 2)).
    output, hidden = encoder_forward(enc_input, w_ih, w_hh, b_ih, b_hh, seq_chunk=4)
    jax.block_until_ready((output, hidden))
    assert output.shape == (seq, batch, enc_units)
    assert hidden.shape == (1, batch, enc_units)
    assert jnp.allclose(output, ref_out, atol=1e-5, rtol=1e-5)
    assert jnp.allclose(hidden, ref_hid, atol=1e-5, rtol=1e-5)

    # bf16 MXU operands (v6e/v7x fast path); elementwise math stays f32, so only
    # a looser tolerance vs. the f32 reference is needed.
    out_bf16, hid_bf16 = encoder_forward(enc_input, w_ih, w_hh, b_ih, b_hh,
                                         seq_chunk=8, matmul_dtype=jnp.bfloat16)
    jax.block_until_ready((out_bf16, hid_bf16))
    assert jnp.allclose(out_bf16, ref_out, atol=5e-2, rtol=5e-2)
    assert jnp.allclose(hid_bf16, ref_hid, atol=5e-2, rtol=5e-2)

    print("KERNEL_OK")
</pallas_src>

<mosaic_0001>
module attributes {stable_mosaic.version = 11 : i64} {
  func.func @gru_kernel(%arg0: i32, %arg1: i32, %arg2: memref<4x8x32xf32, #tpu.memory_space<vmem>>, %arg3: memref<32x96xf32, #tpu.memory_space<vmem>>, %arg4: memref<32x96xf32, #tpu.memory_space<vmem>>, %arg5: memref<1x96xf32, #tpu.memory_space<vmem>>, %arg6: memref<1x32xf32, #tpu.memory_space<vmem>>, %arg7: memref<4x8x32xf32, #tpu.memory_space<vmem>>, %arg8: memref<4x8x96xf32, #tpu.memory_space<vmem>>, %arg9: memref<8x32xf32, #tpu.memory_space<vmem>>) attributes {dimension_semantics = [#tpu.dimension_semantics<parallel>, #tpu.dimension_semantics<arbitrary>], iteration_bounds = array<i64: 1, 2>, scalar_prefetch = 0 : i64, scratch_operands = 2 : i64, tpu.core_type = #tpu.core_type<tc>, window_params = [{transform_indices = @transform_0, window_bounds = array<i64: 4, 8, 32>}, {pipeline_mode = #tpu.pipeline_mode<synchronous>, transform_indices = @transform_1, window_bounds = array<i64: 32, 96>}, {pipeline_mode = #tpu.pipeline_mode<synchronous>, transform_indices = @transform_2, window_bounds = array<i64: 32, 96>}, {pipeline_mode = #tpu.pipeline_mode<synchronous>, transform_indices = @transform_3, window_bounds = array<i64: 1, 96>}, {pipeline_mode = #tpu.pipeline_mode<synchronous>, transform_indices = @transform_4, window_bounds = array<i64: 1, 32>}, {transform_indices = @transform_5, window_bounds = array<i64: 4, 8, 32>}]} {
    %c0_i32 = arith.constant 0 : i32
    %0 = arith.cmpi eq, %arg1, %c0_i32 : i32
    %1 = arith.extui %0 : i1 to i32
    %c0_i32_0 = arith.constant 0 : i32
    %2 = arith.cmpi ne, %1, %c0_i32_0 : i32
    scf.if %2 {
      %cst_51 = arith.constant 0.000000e+00 : f32
      %158 = vector.broadcast %cst_51 : f32 to vector<8x32xf32>
      %c0_52 = arith.constant 0 : index
      %c0_53 = arith.constant 0 : index
      %159 = vector.load %arg9[%c0_52, %c0_53] : memref<8x32xf32, #tpu.memory_space<vmem>>, vector<8x32xf32>
      tpu.vector_store %arg9[%c0_52, %c0_53], %158 {strides = array<i32>} : memref<8x32xf32, #tpu.memory_space<vmem>>, vector<8x32xf32>,
    } else {
    }
    %c0 = arith.constant 0 : index
    %c0_1 = arith.constant 0 : index
    %3 = vector.load %arg3[%c0, %c0_1] : memref<32x96xf32, #tpu.memory_space<vmem>>, vector<32x96xf32>
    %c0_2 = arith.constant 0 : index
    %c0_3 = arith.constant 0 : index
    %4 = vector.load %arg4[%c0_2, %c0_3] : memref<32x96xf32, #tpu.memory_space<vmem>>, vector<32x96xf32>
    %c0_4 = arith.constant 0 : index
    %c0_5 = arith.constant 0 : index
    %5 = vector.load %arg5[%c0_4, %c0_5] : memref<1x96xf32, #tpu.memory_space<vmem>>, vector<1x96xf32>
    %c0_6 = arith.constant 0 : index
    %c0_7 = arith.constant 0 : index
    %6 = vector.load %arg6[%c0_6, %c0_7] : memref<1x32xf32, #tpu.memory_space<vmem>>, vector<1x32xf32>
    %7 = vector.shape_cast %6 : vector<1x32xf32> to vector<1x32xf32>
    %8 = vector.broadcast %7 : vector<1x32xf32> to vector<8x32xf32>
    %c0_8 = arith.constant 0 : index
    %c0_9 = arith.constant 0 : index
    %c0_10 = arith.constant 0 : index
    %9 = vector.load %arg2[%c0_8, %c0_9, %c0_10] : memref<4x8x32xf32, #tpu.memory_space<vmem>>, vector<4x8x32xf32>
    %10 = vector.shape_cast %9 : vector<4x8x32xf32> to vector<32x32xf32>
    %cst = arith.constant dense<0.000000e+00> : vector<32x96xf32>
    %11 = tpu.matmul %10, %3, %cst {dimension_numbers = #tpu.dot_dimension_numbers<[1], [0], [0], [1], [0, 0, 1, 1], [], []>} : vector<32x32xf32>, vector<32x96xf32>, vector<32x96xf32> -> vector<32x96xf32>
    %12 = vector.broadcast %5 : vector<1x96xf32> to vector<32x96xf32>
    %13 = arith.addf %11, %12 : vector<32x96xf32>
    %14 = vector.shape_cast %13 : vector<32x96xf32> to vector<4x8x96xf32>
    %c0_11 = arith.constant 0 : index
    %c0_12 = arith.constant 0 : index
    %c0_13 = arith.constant 0 : index
    %15 = vector.load %arg8[%c0_11, %c0_12, %c0_13] : memref<4x8x96xf32, #tpu.memory_space<vmem>>, vector<4x8x96xf32>
    tpu.vector_store %arg8[%c0_11, %c0_12, %c0_13], %14 {strides = array<i32>} : memref<4x8x96xf32, #tpu.memory_space<vmem>>, vector<4x8x96xf32>,
    %c0_14 = arith.constant 0 : index
    %c0_15 = arith.constant 0 : index
    %16 = vector.load %arg9[%c0_14, %c0_15] : memref<8x32xf32, #tpu.memory_space<vmem>>, vector<8x32xf32>
    %c0_i32_16 = arith.constant 0 : i32
    %17 = arith.index_cast %c0_i32_16 : i32 to index
    %c0_17 = arith.constant 0 : index
    %c0_18 = arith.constant 0 : index
    %18 = vector.load %arg8[%17, %c0_17, %c0_18] : memref<4x8x96xf32, #tpu.memory_space<vmem>>, vector<1x8x96xf32>
    %19 = vector.shape_cast %18 : vector<1x8x96xf32> to vector<8x96xf32>
    %cst_19 = arith.constant dense<0.000000e+00> : vector<8x96xf32>
    %20 = tpu.matmul %16, %4, %cst_19 {dimension_numbers = #tpu.dot_dimension_numbers<[1], [0], [0], [1], [0, 0, 1, 1], [], []>} : vector<8x32xf32>, vector<32x96xf32>, vector<8x96xf32> -> vector<8x96xf32>
    %21 = vector.extract_strided_slice %19 {offsets = [0, 0], sizes = [8, 32], strides = [1, 1]} : vector<8x96xf32> to vector<8x32xf32>
    %22 = vector.extract_strided_slice %20 {offsets = [0, 0], sizes = [8, 32], strides = [1, 1]} : vector<8x96xf32> to vector<8x32xf32>
    %23 = arith.addf %21, %22 : vector<8x32xf32>
    %24 = arith.negf %23 : vector<8x32xf32>
    %25 = math.exp %24 : vector<8x32xf32>
    %cst_20 = arith.constant 1.000000e+00 : f32
    %26 = vector.broadcast %cst_20 : f32 to vector<8x32xf32>
    %27 = arith.addf %26, %25 : vector<8x32xf32>
    %28 = arith.divf %26, %27 : vector<8x32xf32>
    %29 = vector.extract_strided_slice %19 {offsets = [0, 32], sizes = [8, 32], strides = [1, 1]} : vector<8x96xf32> to vector<8x32xf32>
    %30 = vector.extract_strided_slice %20 {offsets = [0, 32], sizes = [8, 32], strides = [1, 1]} : vector<8x96xf32> to vector<8x32xf32>
    %31 = arith.addf %29, %30 : vector<8x32xf32>
    %32 = arith.negf %31 : vector<8x32xf32>
    %33 = math.exp %32 : vector<8x32xf32>
    %cst_21 = arith.constant 1.000000e+00 : f32
    %34 = vector.broadcast %cst_21 : f32 to vector<8x32xf32>
    %35 = arith.addf %34, %33 : vector<8x32xf32>
    %36 = arith.divf %34, %35 : vector<8x32xf32>
    %37 = vector.extract_strided_slice %19 {offsets = [0, 64], sizes = [8, 32], strides = [1, 1]} : vector<8x96xf32> to vector<8x32xf32>
    %38 = vector.extract_strided_slice %20 {offsets = [0, 64], sizes = [8, 32], strides = [1, 1]} : vector<8x96xf32> to vector<8x32xf32>
    %39 = arith.addf %38, %8 : vector<8x32xf32>
    %40 = arith.mulf %28, %39 : vector<8x32xf32>
    %41 = arith.addf %37, %40 : vector<8x32xf32>
    %42 = math.tanh %41 : vector<8x32xf32>
    %cst_22 = arith.constant 1.000000e+00 : f32
    %43 = vector.broadcast %cst_22 : f32 to vector<8x32xf32>
    %44 = arith.subf %43, %36 : vector<8x32xf32>
    %45 = arith.mulf %44, %42 : vector<8x32xf32>
    %46 = arith.mulf %36, %16 : vector<8x32xf32>
    %47 = arith.addf %45, %46 : vector<8x32xf32>
    %48 = arith.index_cast %c0_i32_16 : i32 to index
    %c0_23 = arith.constant 0 : index
    %c0_24 = arith.constant 0 : index
    %49 = vector.load %arg7[%48, %c0_23, %c0_24] : memref<4x8x32xf32, #tpu.memory_space<vmem>>, vector<1x8x32xf32>
    %50 = vector.shape_cast %49 : vector<1x8x32xf32> to vector<8x32xf32>
    %51 = vector.shape_cast %47 : vector<8x32xf32> to vector<1x8x32xf32>
    tpu.vector_store %arg7[%48, %c0_23, %c0_24], %51 {strides = array<i32>} : memref<4x8x32xf32, #tpu.memory_space<vmem>>, vector<1x8x32xf32>,
    %c1_i32 = arith.constant 1 : i32
    %52 = arith.index_cast %c1_i32 : i32 to index
    %c0_25 = arith.constant 0 : index
    %c0_26 = arith.constant 0 : index
    %53 = vector.load %arg8[%52, %c0_25, %c0_26] : memref<4x8x96xf32, #tpu.memory_space<vmem>>, vector<1x8x96xf32>
    %54 = vector.shape_cast %53 : vector<1x8x96xf32> to vector<8x96xf32>
    %cst_27 = arith.constant dense<0.000000e+00> : vector<8x96xf32>
    %55 = tpu.matmul %47, %4, %cst_27 {dimension_numbers = #tpu.dot_dimension_numbers<[1], [0], [0], [1], [0, 0, 1, 1], [], []>} : vector<8x32xf32>, vector<32x96xf32>, vector<8x96xf32> -> vector<8x96xf32>
    %56 = vector.extract_strided_slice %54 {offsets = [0, 0], sizes = [8, 32], strides = [1, 1]} : vector<8x96xf32> to vector<8x32xf32>
    %57 = vector.extract_strided_slice %55 {offsets = [0, 0], sizes = [8, 32], strides = [1, 1]} : vector<8x96xf32> to vector<8x32xf32>
    %58 = arith.addf %56, %57 : vector<8x32xf32>
    %59 = arith.negf %58 : vector<8x32xf32>
    %60 = math.exp %59 : vector<8x32xf32>
    %cst_28 = arith.constant 1.000000e+00 : f32
    %61 = vector.broadcast %cst_28 : f32 to vector<8x32xf32>
    %62 = arith.addf %61, %60 : vector<8x32xf32>
    %63 = arith.divf %61, %62 : vector<8x32xf32>
    %64 = vector.extract_strided_slice %54 {offsets = [0, 32], sizes = [8, 32], strides = [1, 1]} : vector<8x96xf32> to vector<8x32xf32>
    %65 = vector.extract_strided_slice %55 {offsets = [0, 32], sizes = [8, 32], strides = [1, 1]} : vector<8x96xf32> to vector<8x32xf32>
    %66 = arith.addf %64, %65 : vector<8x32xf32>
    %67 = arith.negf %66 : vector<8x32xf32>
    %68 = math.exp %67 : vector<8x32xf32>
    %cst_29 = arith.constant 1.000000e+00 : f32
    %69 = vector.broadcast %cst_29 : f32 to vector<8x32xf32>
    %70 = arith.addf %69, %68 : vector<8x32xf32>
    %71 = arith.divf %69, %70 : vector<8x32xf32>
    %72 = vector.extract_strided_slice %54 {offsets = [0, 64], sizes = [8, 32], strides = [1, 1]} : vector<8x96xf32> to vector<8x32xf32>
    %73 = vector.extract_strided_slice %55 {offsets = [0, 64], sizes = [8, 32], strides = [1, 1]} : vector<8x96xf32> to vector<8x32xf32>
    %74 = arith.addf %73, %8 : vector<8x32xf32>
    %75 = arith.mulf %63, %74 : vector<8x32xf32>
    %76 = arith.addf %72, %75 : vector<8x32xf32>
    %77 = math.tanh %76 : vector<8x32xf32>
    %cst_30 = arith.constant 1.000000e+00 : f32
    %78 = vector.broadcast %cst_30 : f32 to vector<8x32xf32>
    %79 = arith.subf %78, %71 : vector<8x32xf32>
    %80 = arith.mulf %79, %77 : vector<8x32xf32>
    %81 = arith.mulf %71, %47 : vector<8x32xf32>
    %82 = arith.addf %80, %81 : vector<8x32xf32>
    %83 = arith.index_cast %c1_i32 : i32 to index
    %c0_31 = arith.constant 0 : index
    %c0_32 = arith.constant 0 : index
    %84 = vector.load %arg7[%83, %c0_31, %c0_32] : memref<4x8x32xf32, #tpu.memory_space<vmem>>, vector<1x8x32xf32>
    %85 = vector.shape_cast %84 : vector<1x8x32xf32> to vector<8x32xf32>
    %86 = vector.shape_cast %82 : vector<8x32xf32> to vector<1x8x32xf32>
    tpu.vector_store %arg7[%83, %c0_31, %c0_32], %86 {strides = array<i32>} : memref<4x8x32xf32, #tpu.memory_space<vmem>>, vector<1x8x32xf32>,
    %c2_i32 = arith.constant 2 : i32
    %87 = arith.index_cast %c2_i32 : i32 to index
    %c0_33 = arith.constant 0 : index
    %c0_34 = arith.constant 0 : index
    %88 = vector.load %arg8[%87, %c0_33, %c0_34] : memref<4x8x96xf32, #tpu.memory_space<vmem>>, vector<1x8x96xf32>
    %89 = vector.shape_cast %88 : vector<1x8x96xf32> to vector<8x96xf32>
    %cst_35 = arith.constant dense<0.000000e+00> : vector<8x96xf32>
    %90 = tpu.matmul %82, %4, %cst_35 {dimension_numbers = #tpu.dot_dimension_numbers<[1], [0], [0], [1], [0, 0, 1, 1], [], []>} : vector<8x32xf32>, vector<32x96xf32>, vector<8x96xf32> -> vector<8x96xf32>
    %91 = vector.extract_strided_slice %89 {offsets = [0, 0], sizes = [8, 32], strides = [1, 1]} : vector<8x96xf32> to vector<8x32xf32>
    %92 = vector.extract_strided_slice %90 {offsets = [0, 0], sizes = [8, 32], strides = [1, 1]} : vector<8x96xf32> to vector<8x32xf32>
    %93 = arith.addf %91, %92 : vector<8x32xf32>
    %94 = arith.negf %93 : vector<8x32xf32>
    %95 = math.exp %94 : vector<8x32xf32>
    %cst_36 = arith.constant 1.000000e+00 : f32
    %96 = vector.broadcast %cst_36 : f32 to vector<8x32xf32>
    %97 = arith.addf %96, %95 : vector<8x32xf32>
    %98 = arith.divf %96, %97 : vector<8x32xf32>
    %99 = vector.extract_strided_slice %89 {offsets = [0, 32], sizes = [8, 32], strides = [1, 1]} : vector<8x96xf32> to vector<8x32xf32>
    %100 = vector.extract_strided_slice %90 {offsets = [0, 32], sizes = [8, 32], strides = [1, 1]} : vector<8x96xf32> to vector<8x32xf32>
    %101 = arith.addf %99, %100 : vector<8x32xf32>
    %102 = arith.negf %101 : vector<8x32xf32>
    %103 = math.exp %102 : vector<8x32xf32>
    %cst_37 = arith.constant 1.000000e+00 : f32
    %104 = vector.broadcast %cst_37 : f32 to vector<8x32xf32>
    %105 = arith.addf %104, %103 : vector<8x32xf32>
    %106 = arith.divf %104, %105 : vector<8x32xf32>
    %107 = vector.extract_strided_slice %89 {offsets = [0, 64], sizes = [8, 32], strides = [1, 1]} : vector<8x96xf32> to vector<8x32xf32>
    %108 = vector.extract_strided_slice %90 {offsets = [0, 64], sizes = [8, 32], strides = [1, 1]} : vector<8x96xf32> to vector<8x32xf32>
    %109 = arith.addf %108, %8 : vector<8x32xf32>
    %110 = arith.mulf %98, %109 : vector<8x32xf32>
    %111 = arith.addf %107, %110 : vector<8x32xf32>
    %112 = math.tanh %111 : vector<8x32xf32>
    %cst_38 = arith.constant 1.000000e+00 : f32
    %113 = vector.broadcast %cst_38 : f32 to vector<8x32xf32>
    %114 = arith.subf %113, %106 : vector<8x32xf32>
    %115 = arith.mulf %114, %112 : vector<8x32xf32>
    %116 = arith.mulf %106, %82 : vector<8x32xf32>
    %117 = arith.addf %115, %116 : vector<8x32xf32>
    %118 = arith.index_cast %c2_i32 : i32 to index
    %c0_39 = arith.constant 0 : index
    %c0_40 = arith.constant 0 : index
    %119 = vector.load %arg7[%118, %c0_39, %c0_40] : memref<4x8x32xf32, #tpu.memory_space<vmem>>, vector<1x8x32xf32>
    %120 = vector.shape_cast %119 : vector<1x8x32xf32> to vector<8x32xf32>
    %121 = vector.shape_cast %117 : vector<8x32xf32> to vector<1x8x32xf32>
    tpu.vector_store %arg7[%118, %c0_39, %c0_40], %121 {strides = array<i32>} : memref<4x8x32xf32, #tpu.memory_space<vmem>>, vector<1x8x32xf32>,
    %c3_i32 = arith.constant 3 : i32
    %122 = arith.index_cast %c3_i32 : i32 to index
    %c0_41 = arith.constant 0 : index
    %c0_42 = arith.constant 0 : index
    %123 = vector.load %arg8[%122, %c0_41, %c0_42] : memref<4x8x96xf32, #tpu.memory_space<vmem>>, vector<1x8x96xf32>
    %124 = vector.shape_cast %123 : vector<1x8x96xf32> to vector<8x96xf32>
    %cst_43 = arith.constant dense<0.000000e+00> : vector<8x96xf32>
    %125 = tpu.matmul %117, %4, %cst_43 {dimension_numbers = #tpu.dot_dimension_numbers<[1], [0], [0], [1], [0, 0, 1, 1], [], []>} : vector<8x32xf32>, vector<32x96xf32>, vector<8x96xf32> -> vector<8x96xf32>
    %126 = vector.extract_strided_slice %124 {offsets = [0, 0], sizes = [8, 32], strides = [1, 1]} : vector<8x96xf32> to vector<8x32xf32>
    %127 = vector.extract_strided_slice %125 {offsets = [0, 0], sizes = [8, 32], strides = [1, 1]} : vector<8x96xf32> to vector<8x32xf32>
    %128 = arith.addf %126, %127 : vector<8x32xf32>
    %129 = arith.negf %128 : vector<8x32xf32>
    %130 = math.exp %129 : vector<8x32xf32>
    %cst_44 = arith.constant 1.000000e+00 : f32
    %131 = vector.broadcast %cst_44 : f32 to vector<8x32xf32>
    %132 = arith.addf %131, %130 : vector<8x32xf32>
    %133 = arith.divf %131, %132 : vector<8x32xf32>
    %134 = vector.extract_strided_slice %124 {offsets = [0, 32], sizes = [8, 32], strides = [1, 1]} : vector<8x96xf32> to vector<8x32xf32>
    %135 = vector.extract_strided_slice %125 {offsets = [0, 32], sizes = [8, 32], strides = [1, 1]} : vector<8x96xf32> to vector<8x32xf32>
    %136 = arith.addf %134, %135 : vector<8x32xf32>
    %137 = arith.negf %136 : vector<8x32xf32>
    %138 = math.exp %137 : vector<8x32xf32>
    %cst_45 = arith.constant 1.000000e+00 : f32
    %139 = vector.broadcast %cst_45 : f32 to vector<8x32xf32>
    %140 = arith.addf %139, %138 : vector<8x32xf32>
    %141 = arith.divf %139, %140 : vector<8x32xf32>
    %142 = vector.extract_strided_slice %124 {offsets = [0, 64], sizes = [8, 32], strides = [1, 1]} : vector<8x96xf32> to vector<8x32xf32>
    %143 = vector.extract_strided_slice %125 {offsets = [0, 64], sizes = [8, 32], strides = [1, 1]} : vector<8x96xf32> to vector<8x32xf32>
    %144 = arith.addf %143, %8 : vector<8x32xf32>
    %145 = arith.mulf %133, %144 : vector<8x32xf32>
    %146 = arith.addf %142, %145 : vector<8x32xf32>
    %147 = math.tanh %146 : vector<8x32xf32>
    %cst_46 = arith.constant 1.000000e+00 : f32
    %148 = vector.broadcast %cst_46 : f32 to vector<8x32xf32>
    %149 = arith.subf %148, %141 : vector<8x32xf32>
    %150 = arith.mulf %149, %147 : vector<8x32xf32>
    %151 = arith.mulf %141, %117 : vector<8x32xf32>
    %152 = arith.addf %150, %151 : vector<8x32xf32>
    %153 = arith.index_cast %c3_i32 : i32 to index
    %c0_47 = arith.constant 0 : index
    %c0_48 = arith.constant 0 : index
    %154 = vector.load %arg7[%153, %c0_47, %c0_48] : memref<4x8x32xf32, #tpu.memory_space<vmem>>, vector<1x8x32xf32>
    %155 = vector.shape_cast %154 : vector<1x8x32xf32> to vector<8x32xf32>
    %156 = vector.shape_cast %152 : vector<8x32xf32> to vector<1x8x32xf32>
    tpu.vector_store %arg7[%153, %c0_47, %c0_48], %156 {strides = array<i32>} : memref<4x8x32xf32, #tpu.memory_space<vmem>>, vector<1x8x32xf32>,
    %c4_i32 = arith.constant 4 : i32
    %c0_49 = arith.constant 0 : index
    %c0_50 = arith.constant 0 : index
    %157 = vector.load %arg9[%c0_49, %c0_50] : memref<8x32xf32, #tpu.memory_space<vmem>>, vector<8x32xf32>
    tpu.vector_store %arg9[%c0_49, %c0_50], %152 {strides = array<i32>} : memref<8x32xf32, #tpu.memory_space<vmem>>, vector<8x32xf32>,
    return
  }
  func.func @transform_0(%arg0: i32, %arg1: i32) -> (i32, i32, i32) {
    %c0_i32 = arith.constant 0 : i32
    %c0_i32_0 = arith.constant 0 : i32
    return %arg1, %arg0, %c0_i32 : i32, i32, i32
  }
  func.func @transform_1(%arg0: i32, %arg1: i32) -> (i32, i32) {
    %c0_i32 = arith.constant 0 : i32
    %c0_i32_0 = arith.constant 0 : i32
    %c0_i32_1 = arith.constant 0 : i32
    return %c0_i32, %c0_i32_0 : i32, i32
  }
  func.func @transform_2(%arg0: i32, %arg1: i32) -> (i32, i32) {
    %c0_i32 = arith.constant 0 : i32
    %c0_i32_0 = arith.constant 0 : i32
    %c0_i32_1 = arith.constant 0 : i32
    return %c0_i32, %c0_i32_0 : i32, i32
  }
  func.func @transform_3(%arg0: i32, %arg1: i32) -> (i32, i32) {
    %c0_i32 = arith.constant 0 : i32
    %c0_i32_0 = arith.constant 0 : i32
    %c0_i32_1 = arith.constant 0 : i32
    return %c0_i32, %c0_i32_0 : i32, i32
  }
  func.func @transform_4(%arg0: i32, %arg1: i32) -> (i32, i32) {
    %c0_i32 = arith.constant 0 : i32
    %c0_i32_0 = arith.constant 0 : i32
    %c0_i32_1 = arith.constant 0 : i32
    return %c0_i32, %c0_i32_0 : i32, i32
  }
  func.func @transform_5(%arg0: i32, %arg1: i32) -> (i32, i32, i32) {
    %c0_i32 = arith.constant 0 : i32
    %c0_i32_0 = arith.constant 0 : i32
    return %arg1, %arg0, %c0_i32 : i32, i32, i32
  }
}

</mosaic_0001>

<llo_original>
// kernel: tpu_custom_call.1
$region0: #{tpu_custom_call.1}
  #allocation0 [shape = 'u32[]', space=smem, size = 0x4, offset = 0x4, fixed_abs, tag = 'smem constant byte address 0x4 - core index']
  #allocation1 [shape = 'u32[144,128]{1,0:T(1,128)}', space=vmem, size = 0x12000, scoped, tag = 'internal scratch']
  #allocation2 [shape = 'f32[4,8,96]{2,1,0:T(8,128)}', space=vmem, size = 0x4000, scoped, tag = 'scratch operand']
  #allocation3 [shape = 'f32[8,32]{1,0:T(8,128)}', space=vmem, size = 0x1000, scoped, tag = 'scratch operand']
  %s0 = inlined_call_operand.hbm [shape: f32[8,8,32], index: 0, kind: input, shape index: {}]
  %s1 = inlined_call_operand.hbm [shape: f32[32,96], index: 1, kind: input, shape index: {}]
  %s2 = inlined_call_operand.hbm [shape: f32[32,96], index: 2, kind: input, shape index: {}]
  %s3 = inlined_call_operand.vmem [shape: f32[1,96], index: 3, kind: input, shape index: {}]
  %s4 = inlined_call_operand.vmem [shape: f32[1,32], index: 4, kind: input, shape index: {}]
  %s5 = inlined_call_operand.hbm [shape: f32[8,8,32], index: 5, kind: output, shape index: {}]
  %s6 = sld [smem:[#allocation0]]
  $region69: #{tpu_custom_call.1} parent=0
    _
  %s8 = ssub.s32 1, %s6
  %s9 = scalar_select 0, %s8, %s6
  $region1: #{tpu_custom_call.1} parent=0
    #allocation4 [shape = 'u8[32768]{0}', space=vmem, size = 0x8000, scoped, tag = 'input window, operand 0']
    #allocation5 [shape = 's32[2]{0}', space=sflag, size = 0x8, scoped, tag = 'scoped memory for tpu_custom_call.1']
    #allocation6 [shape = 's32[2]{0}', space=sflag, size = 0x8, scoped, tag = 'scoped memory for tpu_custom_call.1']
    #allocation7 [shape = 'u8[16384]{0}', space=vmem, size = 0x4000, scoped, tag = 'input window, operand 1, single buffered']
    #allocation8 [shape = 's32[1]{0}', space=sflag, size = 0x4, scoped, tag = 'scoped memory for tpu_custom_call.1']
    #allocation9 [shape = 'u8[16384]{0}', space=vmem, size = 0x4000, scoped, tag = 'input window, operand 2, single buffered']
    #allocation10 [shape = 'u8[32768]{0}', space=vmem, size = 0x8000, scoped, tag = 'output window, operand 0']
    %10 = vsyncpa [#allocation5], 0
    %s11 = scalar_lea.sflag [#allocation5], 1
    %12 = vsyncpa %s11, 0
    %13 = vsyncpa [#allocation8], 0
    %14 = vsyncpa [#allocation6], 0
    %s15 = scalar_lea.sflag [#allocation6], 1
    %16 = vsyncpa %s15, 0
    loop: start=0, step=1, limit=4
    $region2: #{tpu_custom_call.1} parent=1 // loop_pre_header
      _
    $region3: #{tpu_custom_call.1} parent=1 // loop_header
      %s18 = sphi 0, %s22
      %p19 = scmp.ge.s32.totalorder %s18, 4
      %s25 = sphi 0, %s37
      %s26 = sphi 0, %s33
      %s27 = sphi 0, %s25
      %s28 = sphi 0, %s26
      %s29 = sphi 0, %s27
      %s30 = sphi 0, %s28
      %s42 = sphi 0, %s44
      %s45 = sphi 0, %s42
      %s46 = sphi 0, %s45
      %s62 = sphi 0, %s46
      %s66 = sphi 0, %s66
      %s68 = sphi 0, %s66
      %s69 = sphi 0, %s68
      %s83 = sphi 0, %s69
      %s87 = sphi 0, %s87
      %s89 = sphi 0, %s87
      %s90 = sphi 0, %s89
      %s104 = sphi 0, %s90
      %s108 = sphi 0, %s108
      %s110 = sphi 0, %s108
      %s111 = sphi 0, %s110
      %s125 = sphi 0, %s111
      %s129 = sphi 0, %s129
      %s131 = sphi 0, %s129
      %s132 = sphi 0, %s131
      %s146 = sphi 0, %s132
      %s154 = sphi 0, %s156
      %s157 = sphi 0, %s154
      %s158 = sphi 0, %s157
      %s174 = sphi 0, %s158
    $region4: #{tpu_custom_call.1} parent=1 // loop_header_branch
      %21 = sbr.rel (%p19) target = $region8
    $region5: #{tpu_custom_call.1} parent=1 // loop_body
      %s23 = ssub.s32 %s18, 1
      %s24 = ssub.s32 %s18, 2
      %s31 = sadd.s32 1, %s26
      %p32 = scmp.ge.s32.totalorder %s31, 2
      %s33 = scalar_select %p32, 0, %s31
      %s34 = sadd.s32 1, %s25
      %s35 = scalar_select %p32, %s34, %s25
      %p36 = scmp.ge.s32.totalorder %s35, 1
      %s37 = scalar_select %p36, 0, %s35
      %s38 = ssub.s32 %s26, %s33
      %s39 = ssub.s32 %s25, %s37
      %s40 = sor.u32 %s38, %s39
      %p41 = scmp.eq.s32.totalorder %s40, 0
      %s43 = sadd.s32 %s42, 1
      %s44 = scalar_select %p41, %s42, %s43
      %p47 = pneg %p41
      %p48 = scmp.eq.s32.totalorder %s18, 1
      %p49 = por %p47, %p48
      %p50 = scmp.ne.s32.totalorder %s42, %s45
      %p51 = scmp.eq.s32.totalorder %s18, 0
      %p52 = por %p50, %p51
      %p53 = scmp.ne.s32.totalorder %s42, %s45
      %p54 = scmp.eq.s32.totalorder %s23, 1
      %p55 = por %p53, %p54
      %p56 = scmp.ne.s32.totalorder %s45, %s46
      %p57 = scmp.eq.s32.totalorder %s23, 0
      %p58 = por %p56, %p57
      %p59 = scmp.ne.s32.totalorder %s45, %s46
      %p60 = scmp.eq.s32.totalorder %s24, 1
      %p61 = por %p59, %p60
      %p63 = scmp.ne.s32.totalorder %s46, %s62
      %p64 = scmp.eq.s32.totalorder %s24, 0
      %p65 = por %p63, %p64
      %s67 = sadd.s32 %s66, 1
      %p70 = scmp.eq.s32.totalorder %s18, 1
      %p71 = scmp.ne.s32.totalorder %s66, %s68
      %p72 = scmp.eq.s32.totalorder %s18, 0
      %p73 = por %p71, %p72
      %p74 = scmp.ne.s32.totalorder %s66, %s68
      %p75 = scmp.eq.s32.totalorder %s23, 1
      %p76 = por %p74, %p75
      %p77 = scmp.ne.s32.totalorder %s68, %s69
      %p78 = scmp.eq.s32.totalorder %s23, 0
      %p79 = por %p77, %p78
      %p80 = scmp.ne.s32.totalorder %s68, %s69
      %p81 = scmp.eq.s32.totalorder %s24, 1
      %p82 = por %p80, %p81
      %p84 = scmp.ne.s32.totalorder %s69, %s83
      %p85 = scmp.eq.s32.totalorder %s24, 0
      %p86 = por %p84, %p85
      %s88 = sadd.s32 %s87, 1
      %p91 = scmp.eq.s32.totalorder %s18, 1
      %p92 = scmp.ne.s32.totalorder %s87, %s89
      %p93 = scmp.eq.s32.totalorder %s18, 0
      %p94 = por %p92, %p93
      %p95 = scmp.ne.s32.totalorder %s87, %s89
      %p96 = scmp.eq.s32.totalorder %s23, 1
      %p97 = por %p95, %p96
      %p98 = scmp.ne.s32.totalorder %s89, %s90
      %p99 = scmp.eq.s32.totalorder %s23, 0
      %p100 = por %p98, %p99
      %p101 = scmp.ne.s32.totalorder %s89, %s90
      %p102 = scmp.eq.s32.totalorder %s24, 1
      %p103 = por %p101, %p102
      %p105 = scmp.ne.s32.totalorder %s90, %s104
      %p106 = scmp.eq.s32.totalorder %s24, 0
      %p107 = por %p105, %p106
      %s109 = sadd.s32 %s108, 1
      %p112 = scmp.eq.s32.totalorder %s18, 1
      %p113 = scmp.ne.s32.totalorder %s108, %s110
      %p114 = scmp.eq.s32.totalorder %s18, 0
      %p115 = por %p113, %p114
      %p116 = scmp.ne.s32.totalorder %s108, %s110
      %p117 = scmp.eq.s32.totalorder %s23, 1
      %p118 = por %p116, %p117
      %p119 = scmp.ne.s32.totalorder %s110, %s111
      %p120 = scmp.eq.s32.totalorder %s23, 0
      %p121 = por %p119, %p120
      %p122 = scmp.ne.s32.totalorder %s110, %s111
      %p123 = scmp.eq.s32.totalorder %s24, 1
      %p124 = por %p122, %p123
      %p126 = scmp.ne.s32.totalorder %s111, %s125
      %p127 = scmp.eq.s32.totalorder %s24, 0
      %p128 = por %p126, %p127
      %s130 = sadd.s32 %s129, 1
      %p133 = scmp.eq.s32.totalorder %s18, 1
      %p134 = scmp.ne.s32.totalorder %s129, %s131
      %p135 = scmp.eq.s32.totalorder %s18, 0
      %p136 = por %p134, %p135
      %p137 = scmp.ne.s32.totalorder %s129, %s131
      %p138 = scmp.eq.s32.totalorder %s23, 1
      %p139 = por %p137, %p138
      %p140 = scmp.ne.s32.totalorder %s131, %s132
      %p141 = scmp.eq.s32.totalorder %s23, 0
      %p142 = por %p140, %p141
      %p143 = scmp.ne.s32.totalorder %s131, %s132
      %p144 = scmp.eq.s32.totalorder %s24, 1
      %p145 = por %p143, %p144
      %p147 = scmp.ne.s32.totalorder %s132, %s146
      %p148 = scmp.eq.s32.totalorder %s24, 0
      %p149 = por %p147, %p148
      %s150 = ssub.s32 %s26, %s33
      %s151 = ssub.s32 %s25, %s37
      %s152 = sor.u32 %s150, %s151
      %p153 = scmp.eq.s32.totalorder %s152, 0
      %s155 = sadd.s32 %s154, 1
      %s156 = scalar_select %p153, %s154, %s155
      %p159 = pneg %p153
      %p160 = scmp.eq.s32.totalorder %s18, 1
      %p161 = por %p159, %p160
      %p162 = scmp.ne.s32.totalorder %s154, %s157
      %p163 = scmp.eq.s32.totalorder %s18, 0
      %p164 = por %p162, %p163
      %p165 = scmp.ne.s32.totalorder %s154, %s157
      %p166 = scmp.eq.s32.totalorder %s23, 1
      %p167 = por %p165, %p166
      %p168 = scmp.ne.s32.totalorder %s157, %s158
      %p169 = scmp.eq.s32.totalorder %s23, 0
      %p170 = por %p168, %p169
      %p171 = scmp.ne.s32.totalorder %s157, %s158
      %p172 = scmp.eq.s32.totalorder %s24, 1
      %p173 = por %p171, %p172
      %p175 = scmp.ne.s32.totalorder %s158, %s174
      %p176 = scmp.eq.s32.totalorder %s24, 0
      %p177 = por %p175, %p176
      %p178 = scmp.le.s32.totalorder 1, %s18
      %p179 = scmp.lt.s32.totalorder %s18, 3
      %p180 = pnand %p178, %p179
      %p181 = pneg %p180
      // Predicated region
      $region9: #{tpu_custom_call.1} parent=5 // pred_check
        _
      $region10: #{tpu_custom_call.1} parent=5 // pred_check_branch
        %183 = sbr.rel (%p180) target = $region12
      $region11: #{tpu_custom_call.1} parent=5 // pred_region
        %s184 = ssub.s32 %s18, 1
        // Predicated region
        $region13: #{tpu_custom_call.1} parent=11 // pred_check
          %p185 = pneg %p79
        $region14: #{tpu_custom_call.1} parent=11 // pred_check_branch
          %187 = sbr.rel (%p185) target = $region16
        $region15: #{tpu_custom_call.1} parent=11 // pred_region
          %s189 = ssub.s32 512, 512
          %190 = vsyncadd [#allocation8], %s189
          %s191 = sshll.u32 [#allocation7], 4
          %s192 = int_to_ptr.vmem [resolvable:$true] %s191
          %197 = dma.hbm_to_vmem [thread:$0]  %s1, 512, %s192, [#allocation8], 128, 128, 8
        $region16: #{tpu_custom_call.1} parent=11 // pred_fallthru
          _
        // Predicated region
        $region17: #{tpu_custom_call.1} parent=11 // pred_check
          %p198 = pneg %p100
        $region18: #{tpu_custom_call.1} parent=11 // pred_check_branch
          %200 = sbr.rel (%p198) target = $region20
        $region19: #{tpu_custom_call.1} parent=11 // pred_region
          %s202 = ssub.s32 512, 512
          %203 = vsyncadd [#allocation8], %s202
          %s204 = sshll.u32 [#allocation9], 4
          %s205 = int_to_ptr.vmem [resolvable:$true] %s204
          %210 = dma.hbm_to_vmem [thread:$0]  %s2, 512, %s205, [#allocation8], 128, 128, 8
        $region20: #{tpu_custom_call.1} parent=11 // pred_fallthru
          _
        // Predicated region
        $region21: #{tpu_custom_call.1} parent=11 // pred_check
          %p211 = pneg %p121
        $region22: #{tpu_custom_call.1} parent=11 // pred_check_branch
          %213 = sbr.rel (%p211) target = $region24
        $region23: #{tpu_custom_call.1} parent=11 // pred_region
          _
        $region24: #{tpu_custom_call.1} parent=11 // pred_fallthru
          _
        // Predicated region
        $region25: #{tpu_custom_call.1} parent=11 // pred_check
          %p214 = pneg %p142
        $region26: #{tpu_custom_call.1} parent=11 // pred_check_branch
          %216 = sbr.rel (%p214) target = $region28
        $region27: #{tpu_custom_call.1} parent=11 // pred_region
          _
        $region28: #{tpu_custom_call.1} parent=11 // pred_fallthru
          _
      $region12: #{tpu_custom_call.1} parent=5 // pred_fallthru
        _
      %p217 = scmp.lt.s32.totalorder %s18, 2
      // Predicated region
      $region29: #{tpu_custom_call.1} parent=5 // pred_check
        %p218 = pneg %p217
      $region30: #{tpu_custom_call.1} parent=5 // pred_check_branch
        %220 = sbr.rel (%p218) target = $region32
      $region31: #{tpu_custom_call.1} parent=5 // pred_region
        // Predicated region
        $region33: #{tpu_custom_call.1} parent=31 // pred_check
          %p221 = pneg %p52
        $region34: #{tpu_custom_call.1} parent=31 // pred_check_branch
          %223 = sbr.rel (%p221) target = $region36
        $region35: #{tpu_custom_call.1} parent=31 // pred_region
          %s224 = sand.u32 %s42, 1
          %s225 = scalar_lea.sflag [#allocation5], %s224
          %s226 = sand.u32 %s42, 1
          %s227 = smul.addr %s226, 32
          %s228 = scalar_lea.vmem [#allocation4], %s227
          %s229 = smul.u32 4, %s26
          %s231 = ssub.s32 512, 512
          %232 = vsyncadd %s225, %s231
          %s233 = sadd.s32 %s25, %s229
          %s234 = smul.addr %s233, 128
          %s235 = scalar_lea.hbm %s0, %s234
          %s236 = sshll.u32 %s228, 4
          %s237 = int_to_ptr.vmem [resolvable:$true] %s236
          %242 = dma.hbm_to_vmem [thread:$0]  %s235, 512, %s237, %s225, 128, 128, 8
        $region36: #{tpu_custom_call.1} parent=31 // pred_fallthru
          _
      $region32: #{tpu_custom_call.1} parent=5 // pred_fallthru
        _
      %p243 = scmp.le.s32.totalorder 1, %s18
      %p244 = scmp.lt.s32.totalorder %s18, 3
      %p245 = pnand %p243, %p244
      %p246 = pneg %p245
      // Predicated region
      $region37: #{tpu_custom_call.1} parent=5 // pred_check
        _
      $region38: #{tpu_custom_call.1} parent=5 // pred_check_branch
        %248 = sbr.rel (%p245) target = $region40
      $region39: #{tpu_custom_call.1} parent=5 // pred_region
        %s249 = ssub.s32 %s18, 1
        %s250 = sand.u32 %s45, 1
        %s251 = scalar_lea.sflag [#allocation5], %s250
        %s252 = sand.u32 %s45, 1
        %s253 = smul.addr %s252, 32
        %s254 = scalar_lea.vmem [#allocation4], %s253
        // Predicated region
        $region41: #{tpu_custom_call.1} parent=39 // pred_check
          %p255 = pneg %p58
        $region42: #{tpu_custom_call.1} parent=39 // pred_check_branch
          %257 = sbr.rel (%p255) target = $region44
        $region43: #{tpu_custom_call.1} parent=39 // pred_region
          %258 = dma.done %s251, 512
        $region44: #{tpu_custom_call.1} parent=39 // pred_fallthru
          _
        // Predicated region
        $region45: #{tpu_custom_call.1} parent=39 // pred_check
          %p259 = pneg %p79
        $region46: #{tpu_custom_call.1} parent=39 // pred_check_branch
          %261 = sbr.rel (%p259) target = $region48
        $region47: #{tpu_custom_call.1} parent=39 // pred_region
          %262 = dma.done [#allocation8], 512
        $region48: #{tpu_custom_call.1} parent=39 // pred_fallthru
          _
        // Predicated region
        $region49: #{tpu_custom_call.1} parent=39 // pred_check
          %p263 = pneg %p100
        $region50: #{tpu_custom_call.1} parent=39 // pred_check_branch
          %265 = sbr.rel (%p263) target = $region52
        $region51: #{tpu_custom_call.1} parent=39 // pred_region
          %266 = dma.done [#allocation8], 512
        $region52: #{tpu_custom_call.1} parent=39 // pred_fallthru
          _
        %s267 = sand.u32 %s45, 1
        %s268 = scalar_lea.sflag [#allocation5], %s267
        %s269 = sand.u32 %s45, 1
        %s270 = smul.addr %s269, 32
        %s271 = scalar_lea.vmem [#allocation4], %s270
        %p272 = pneg %p58
        %p273 = pneg %p55
        %p274 = pneg %p79
        %p275 = pneg %p76
        %p276 = pneg %p100
        %p277 = pneg %p97
        %p278 = pneg %p121
        %p279 = pneg %p118
        %p280 = pneg %p142
        %p281 = pneg %p139
        %p282 = pneg %p170
        %p283 = pneg %p167
        %s284 = sand.u32 %s157, 1
        %s285 = scalar_lea.sflag [#allocation6], %s284
        %s286 = sand.u32 %s157, 1
        %s287 = smul.addr %s286, 32
        %s288 = scalar_lea.vmem [#allocation10], %s287
        %s289 = smul.u32 4, %s28
        %s290 = smul.u32 4, %s28
        %p291 = scmp.eq.s32.totalorder %s28, 0
        // Predicated region
        $region53: #{tpu_custom_call.1} parent=39 // pred_check
          %p292 = pneg %p291
        $region54: #{tpu_custom_call.1} parent=39 // pred_check_branch
          %294 = sbr.rel (%p292) target = $region56
        $region55: #{tpu_custom_call.1} parent=39 // pred_region
          %vm295 = vcmask 261120
          %296 = vst.msk [vmem:[#allocation3] sm:$0xff] %vm295, 0.0
        $region56: #{tpu_custom_call.1} parent=39 // pred_fallthru
          _
        %v297 = vld [vmem:[#allocation7] sm:$0xff]
        %v298 = vld [vmem:[#allocation7 + $0x8] sm:$0xff]
        %v299 = vld [vmem:[#allocation7 + $0x10] sm:$0xff]
        %v300 = vld [vmem:[#allocation7 + $0x18] sm:$0xff]
        %v301 = vld [vmem:[#allocation9] sm:$0xff]
        %v302 = vld [vmem:[#allocation9 + $0x8] sm:$0xff]
        %v303 = vld [vmem:[#allocation9 + $0x10] sm:$0xff]
        %v304 = vld [vmem:[#allocation9 + $0x18] sm:$0xff]
        %v305 = vld [vmem:[%s3] sm:$0x1]
        %v306 = vld [vmem:[%s4] sm:$0x1]
        %v308 = vlaneseq
        %v309 = vshrl.u32 %v308, 7
        %v310 = vsub.s32 0, %v309
        %v311 = vrot.slane %v306, %v310
        %v312 = vld [vmem:[%s254] sm:$0xff]
        %v313 = vld [vmem:[%s254 + $0x8] sm:$0xff]
        %v314 = vld [vmem:[%s254 + $0x10] sm:$0xff]
        %v315 = vld [vmem:[%s254 + $0x18] sm:$0xff]
        %v317 = vlaneseq
        %v318 = vshrl.u32 %v317, 7
        %v319 = vsub.s32 0, %v318
        %v320 = vrot.slane %v305, %v319
        %vm322 = vcmask 261120
        %v324 = vsel %vm322, %v312, 0
        %v327 = vsel %vm322, %v313, 0
        %v330 = vsel %vm322, %v314, 0
        %v333 = vsel %vm322, %v315, 0
        %335 = vmatprep.subr.mxu0 0.0
        %336 = vmatpush1.msra.mxu0 0.0
        %337 = vmatprep.subr.mxu0 0.0
        %338 = vmatpush1.msra.mxu0 0.0
        %339 = vmatprep.subr.mxu0 0.0
        %340 = vmatpush1.msra.mxu0 0.0
        %341 = vmatprep.subr.mxu0 0.0
        %342 = vmatpush1.msra.mxu0 0.0
        %343 = vmatprep.subr.mxu0 0.0
        %344 = vmatpush1.msra.mxu0 0.0
        %345 = vmatprep.subr.mxu0 0.0
        %346 = vmatpush1.msra.mxu0 0.0
        %347 = vmatprep.subr.mxu0 0.0
        %348 = vmatpush1.msra.mxu0 0.0
        %349 = vmatprep.subr.mxu0 0.0
        %350 = vmatpush1.msra.mxu0 0.0
        %351 = vmatprep.subr.mxu0 0.0
        %352 = vmatpush1.msra.mxu0 0.0
        %353 = vmatprep.subr.mxu0 0.0
        %354 = vmatpush1.msra.mxu0 0.0
        %355 = vmatprep.subr.mxu0 0.0
        %356 = vmatpush1.msra.mxu0 0.0
        %357 = vmatprep.subr.mxu0 0.0
        %358 = vmatpush1.msra.mxu0 0.0
        %359 = vmatprep.subr.mxu0 0.0
        %360 = vmatpush1.msra.mxu0 %v300
        %361 = vmatprep.subr.mxu0 0.0
        %362 = vmatpush1.msra.mxu0 %v299
        %363 = vmatprep.subr.mxu0 0.0
        %364 = vmatpush1.msra.mxu0 %v298
        %365 = vmatprep.subr.mxu0 0.0
        %366 = vmatpush1.msra.mxu0 %v297
        %367 = vmatprep.subr.mxu0 0.0
        %368 = vmatpush2.msra.mxu0 0.0
        %369 = vmatprep.subr.mxu0 0.0
        %370 = vmatpush2.msra.mxu0 0.0
        %371 = vmatprep.subr.mxu0 0.0
        %372 = vmatpush2.msra.mxu0 0.0
        %373 = vmatprep.subr.mxu0 0.0
        %374 = vmatpush2.msra.mxu0 0.0
        %375 = vmatprep.subr.mxu0 0.0
        %376 = vmatpush2.msra.mxu0 0.0
        %377 = vmatprep.subr.mxu0 0.0
        %378 = vmatpush2.msra.mxu0 0.0
        %379 = vmatprep.subr.mxu0 0.0
        %380 = vmatpush2.msra.mxu0 0.0
        %381 = vmatprep.subr.mxu0 0.0
        %382 = vmatpush2.msra.mxu0 0.0
        %383 = vmatprep.subr.mxu0 0.0
        %384 = vmatpush2.msra.mxu0 0.0
        %385 = vmatprep.subr.mxu0 0.0
        %386 = vmatpush2.msra.mxu0 0.0
        %387 = vmatprep.subr.mxu0 0.0
        %388 = vmatpush2.msra.mxu0 0.0
        %389 = vmatprep.subr.mxu0 0.0
        %390 = vmatpush2.msra.mxu0 0.0
        %391 = vmatprep.subr.mxu0 0.0
        %392 = vmatpush2.msra.mxu0 0.0
        %393 = vmatprep.subr.mxu0 0.0
        %394 = vmatpush2.msra.mxu0 0.0
        %395 = vmatprep.subr.mxu0 0.0
        %396 = vmatpush2.msra.mxu0 0.0
        %397 = vmatprep.subr.mxu0 0.0
        %398 = vmatpush2.msra.mxu0 0.0
        %399 = vmatprep.mubr.f32.mxu0 0.0
        %400 = vmatmul.mubr.f32.gmra.mxu0 %v324
        %v401 = vpop.f32.mrf.mxu0
        %v402 = vadd.f32 %v320, %v401
        %v403 = vpop.f32.mrf.mxu0
        %404 = vmatprep.mubr.f32.mxu0 0.0
        %405 = vmatmul.mubr.f32.gmra.mxu0 %v327
        %v406 = vpop.f32.mrf.mxu0
        %v407 = vadd.f32 %v320, %v406
        %v408 = vpop.f32.mrf.mxu0
        %409 = vmatprep.mubr.f32.mxu0 0.0
        %410 = vmatmul.mubr.f32.gmra.mxu0 %v330
        %v411 = vpop.f32.mrf.mxu0
        %v412 = vadd.f32 %v320, %v411
        %v413 = vpop.f32.mrf.mxu0
        %414 = vmatprep.mubr.f32.mxu0 0.0
        %415 = vmatmul.mubr.f32.gmra.mxu0 %v333
        %v416 = vpop.f32.mrf.mxu0
        %v417 = vadd.f32 %v320, %v416
        %v418 = vpop.f32.mrf.mxu0
        %419 = vdwg.mxu0
        %vm420 = vcmask 785408
        %421 = vst.msk [vmem:[#allocation2] sm:$0xff] %vm420, %v402
        %422 = vst.msk [vmem:[#allocation2 + $0x8] sm:$0xff] %vm420, %v407
        %423 = vst.msk [vmem:[#allocation2 + $0x10] sm:$0xff] %vm420, %v412
        %424 = vst.msk [vmem:[#allocation2 + $0x18] sm:$0xff] %vm420, %v417
        %v425 = vld [vmem:[#allocation3] sm:$0xff]
        %v426 = vld [vmem:[#allocation2] sm:$0xff]
        %v428 = vsel %vm322, %v425, 0
        %430 = vmatprep.subr.mxu0 0.0
        %431 = vmatpush1.msra.mxu0 0.0
        %432 = vmatprep.subr.mxu0 0.0
        %433 = vmatpush1.msra.mxu0 0.0
        %434 = vmatprep.subr.mxu0 0.0
        %435 = vmatpush1.msra.mxu0 0.0
        %436 = vmatprep.subr.mxu0 0.0
        %437 = vmatpush1.msra.mxu0 0.0
        %438 = vmatprep.subr.mxu0 0.0
        %439 = vmatpush1.msra.mxu0 0.0
        %440 = vmatprep.subr.mxu0 0.0
        %441 = vmatpush1.msra.mxu0 0.0
        %442 = vmatprep.subr.mxu0 0.0
        %443 = vmatpush1.msra.mxu0 0.0
        %444 = vmatprep.subr.mxu0 0.0
        %445 = vmatpush1.msra.mxu0 0.0
        %446 = vmatprep.subr.mxu0 0.0
        %447 = vmatpush1.msra.mxu0 0.0
        %448 = vmatprep.subr.mxu0 0.0
        %449 = vmatpush1.msra.mxu0 0.0
        %450 = vmatprep.subr.mxu0 0.0
        %451 = vmatpush1.msra.mxu0 0.0
        %452 = vmatprep.subr.mxu0 0.0
        %453 = vmatpush1.msra.mxu0 0.0
        %454 = vmatprep.subr.mxu0 0.0
        %455 = vmatpush1.msra.mxu0 %v304
        %456 = vmatprep.subr.mxu0 0.0
        %457 = vmatpush1.msra.mxu0 %v303
        %458 = vmatprep.subr.mxu0 0.0
        %459 = vmatpush1.msra.mxu0 %v302
        %460 = vmatprep.subr.mxu0 0.0
        %461 = vmatpush1.msra.mxu0 %v301
        %462 = vmatprep.subr.mxu0 0.0
        %463 = vmatpush2.msra.mxu0 0.0
        %464 = vmatprep.subr.mxu0 0.0
        %465 = vmatpush2.msra.mxu0 0.0
        %466 = vmatprep.subr.mxu0 0.0
        %467 = vmatpush2.msra.mxu0 0.0
        %468 = vmatprep.subr.mxu0 0.0
        %469 = vmatpush2.msra.mxu0 0.0
        %470 = vmatprep.subr.mxu0 0.0
        %471 = vmatpush2.msra.mxu0 0.0
        %472 = vmatprep.subr.mxu0 0.0
        %473 = vmatpush2.msra.mxu0 0.0
        %474 = vmatprep.subr.mxu0 0.0
        %475 = vmatpush2.msra.mxu0 0.0
        %476 = vmatprep.subr.mxu0 0.0
        %477 = vmatpush2.msra.mxu0 0.0
        %478 = vmatprep.subr.mxu0 0.0
        %479 = vmatpush2.msra.mxu0 0.0
        %480 = vmatprep.subr.mxu0 0.0
        %481 = vmatpush2.msra.mxu0 0.0
        %482 = vmatprep.subr.mxu0 0.0
        %483 = vmatpush2.msra.mxu0 0.0
        %484 = vmatprep.subr.mxu0 0.0
        %485 = vmatpush2.msra.mxu0 0.0
        %486 = vmatprep.subr.mxu0 0.0
        %487 = vmatpush2.msra.mxu0 0.0
        %488 = vmatprep.subr.mxu0 0.0
        %489 = vmatpush2.msra.mxu0 0.0
        %490 = vmatprep.subr.mxu0 0.0
        %491 = vmatpush2.msra.mxu0 0.0
        %492 = vmatprep.subr.mxu0 0.0
        %493 = vmatpush2.msra.mxu0 0.0
        %494 = vmatprep.mubr.f32.mxu0 0.0
        %495 = vmatmul.mubr.f32.gmra.mxu0 %v428
        %v496 = vpop.f32.mrf.mxu0
        %v497 = vadd.f32 0.0, %v496
        %v498 = vpop.f32.mrf.mxu0
        %499 = vdwg.mxu0
        %v500 = vadd.f32 %v426, %v497
        %v501 = vxor.u32 %v500, 2147483648
        %v502 = vmul.f32 %v501, 1.442695
        %v503 = vpow.pop %v502
        %v504 = vadd.f32 %v503, 1.0
        %v505 = vrcp.pop %v504
        %v506 = vmul.f32 1.0, %v505
        %507 = vrot.lane.b32.xlu0 %v311, 64
        %v508 = vpop.permute.xlu0 %507
        %v510 = vadd.f32 %v497, %v508
        %512 = vrot.lane.b32.xlu0 %v510, 64
        %v513 = vpop.permute.xlu0 %512
        %v515 = vmul.f32 %v506, %v513
        %517 = vrot.lane.b32.xlu0 %v515, 64
        %v518 = vpop.permute.xlu0 %517
        %v520 = vadd.f32 %v426, %v518
        %v521 = vtanh.pop %v520
        %v522 = vsub.f32 1.0, %v506
        %524 = vrot.lane.b32.xlu0 %v521, 96
        %v525 = vpop.permute.xlu0 %524
        %v527 = vmul.f32 %v522, %v525
        %528 = vrot.lane.b32.xlu0 %v425, 32
        %v529 = vpop.permute.xlu0 %528
        %v531 = vmul.f32 %v506, %v529
        %v532 = vadd.f32 %v527, %v531
        %534 = vrot.lane.b32.xlu0 %v532, 96
        %v535 = vpop.permute.xlu0 %534
        %537 = vst.msk [vmem:[%s288] sm:$0xff] %vm322, %v535
        %s538 = scalar_lea.vmem [#allocation2], 8
        %v539 = vld [vmem:[%s538] sm:$0xff]
        %v540 = vsel %vm322, %v535, 0
        %542 = vmatprep.subr.mxu0 0.0
        %543 = vmatpush1.msra.mxu0 0.0
        %544 = vmatprep.subr.mxu0 0.0
        %545 = vmatpush1.msra.mxu0 0.0
        %546 = vmatprep.subr.mxu0 0.0
        %547 = vmatpush1.msra.mxu0 0.0
        %548 = vmatprep.subr.mxu0 0.0
        %549 = vmatpush1.msra.mxu0 0.0
        %550 = vmatprep.subr.mxu0 0.0
        %551 = vmatpush1.msra.mxu0 0.0
        %552 = vmatprep.subr.mxu0 0.0
        %553 = vmatpush1.msra.mxu0 0.0
        %554 = vmatprep.subr.mxu0 0.0
        %555 = vmatpush1.msra.mxu0 0.0
        %556 = vmatprep.subr.mxu0 0.0
        %557 = vmatpush1.msra.mxu0 0.0
        %558 = vmatprep.subr.mxu0 0.0
        %559 = vmatpush1.msra.mxu0 0.0
        %560 = vmatprep.subr.mxu0 0.0
        %561 = vmatpush1.msra.mxu0 0.0
        %562 = vmatprep.subr.mxu0 0.0
        %563 = vmatpush1.msra.mxu0 0.0
        %564 = vmatprep.subr.mxu0 0.0
        %565 = vmatpush1.msra.mxu0 0.0
        %566 = vmatprep.subr.mxu0 0.0
        %567 = vmatpush1.msra.mxu0 %v304
        %568 = vmatprep.subr.mxu0 0.0
        %569 = vmatpush1.msra.mxu0 %v303
        %570 = vmatprep.subr.mxu0 0.0
        %571 = vmatpush1.msra.mxu0 %v302
        %572 = vmatprep.subr.mxu0 0.0
        %573 = vmatpush1.msra.mxu0 %v301
        %574 = vmatprep.subr.mxu0 0.0
        %575 = vmatpush2.msra.mxu0 0.0
        %576 = vmatprep.subr.mxu0 0.0
        %577 = vmatpush2.msra.mxu0 0.0
        %578 = vmatprep.subr.mxu0 0.0
        %579 = vmatpush2.msra.mxu0 0.0
        %580 = vmatprep.subr.mxu0 0.0
        %581 = vmatpush2.msra.mxu0 0.0
        %582 = vmatprep.subr.mxu0 0.0
        %583 = vmatpush2.msra.mxu0 0.0
        %584 = vmatprep.subr.mxu0 0.0
        %585 = vmatpush2.msra.mxu0 0.0
        %586 = vmatprep.subr.mxu0 0.0
        %587 = vmatpush2.msra.mxu0 0.0
        %588 = vmatprep.subr.mxu0 0.0
        %589 = vmatpush2.msra.mxu0 0.0
        %590 = vmatprep.subr.mxu0 0.0
        %591 = vmatpush2.msra.mxu0 0.0
        %592 = vmatprep.subr.mxu0 0.0
        %593 = vmatpush2.msra.mxu0 0.0
        %594 = vmatprep.subr.mxu0 0.0
        %595 = vmatpush2.msra.mxu0 0.0
        %596 = vmatprep.subr.mxu0 0.0
        %597 = vmatpush2.msra.mxu0 0.0
        %598 = vmatprep.subr.mxu0 0.0
        %599 = vmatpush2.msra.mxu0 0.0
        %600 = vmatprep.subr.mxu0 0.0
        %601 = vmatpush2.msra.mxu0 0.0
        %602 = vmatprep.subr.mxu0 0.0
        %603 = vmatpush2.msra.mxu0 0.0
        %604 = vmatprep.subr.mxu0 0.0
        %605 = vmatpush2.msra.mxu0 0.0
        %606 = vmatprep.mubr.f32.mxu0 0.0
        %607 = vmatmul.mubr.f32.gmra.mxu0 %v540
        %v608 = vpop.f32.mrf.mxu0
        %v609 = vadd.f32 0.0, %v608
        %v610 = vpop.f32.mrf.mxu0
        %611 = vdwg.mxu0
        %v612 = vadd.f32 %v539, %v609
        %v613 = vxor.u32 %v612, 2147483648
        %v614 = vmul.f32 %v613, 1.442695
        %v615 = vpow.pop %v614
        %v616 = vadd.f32 %v615, 1.0
        %v617 = vrcp.pop %v616
        %v618 = vmul.f32 1.0, %v617
        %v619 = vadd.f32 %v609, %v508
        %621 = vrot.lane.b32.xlu0 %v619, 64
        %v622 = vpop.permute.xlu0 %621
        %v624 = vmul.f32 %v618, %v622
        %626 = vrot.lane.b32.xlu0 %v624, 64
        %v627 = vpop.permute.xlu0 %626
        %v629 = vadd.f32 %v539, %v627
        %v630 = vtanh.pop %v629
        %v631 = vsub.f32 1.0, %v618
        %633 = vrot.lane.b32.xlu0 %v630, 96
        %v634 = vpop.permute.xlu0 %633
        %v636 = vmul.f32 %v631, %v634
        %v637 = vmul.f32 %v618, %v532
        %v638 = vadd.f32 %v636, %v637
        %640 = vrot.lane.b32.xlu0 %v638, 96
        %v641 = vpop.permute.xlu0 %640
        %s643 = scalar_lea.vmem %s288, 8 [#allocation10]
        %644 = vst.msk [vmem:[%s643] sm:$0xff] %vm322, %v641
        %s645 = scalar_lea.vmem [#allocation2], 16
        %v646 = vld [vmem:[%s645] sm:$0xff]
        %v647 = vsel %vm322, %v641, 0
        %649 = vmatprep.subr.mxu0 0.0
        %650 = vmatpush1.msra.mxu0 0.0
        %651 = vmatprep.subr.mxu0 0.0
        %652 = vmatpush1.msra.mxu0 0.0
        %653 = vmatprep.subr.mxu0 0.0
        %654 = vmatpush1.msra.mxu0 0.0
        %655 = vmatprep.subr.mxu0 0.0
        %656 = vmatpush1.msra.mxu0 0.0
        %657 = vmatprep.subr.mxu0 0.0
        %658 = vmatpush1.msra.mxu0 0.0
        %659 = vmatprep.subr.mxu0 0.0
        %660 = vmatpush1.msra.mxu0 0.0
        %661 = vmatprep.subr.mxu0 0.0
        %662 = vmatpush1.msra.mxu0 0.0
        %663 = vmatprep.subr.mxu0 0.0
        %664 = vmatpush1.msra.mxu0 0.0
        %665 = vmatprep.subr.mxu0 0.0
        %666 = vmatpush1.msra.mxu0 0.0
        %667 = vmatprep.subr.mxu0 0.0
        %668 = vmatpush1.msra.mxu0 0.0
        %669 = vmatprep.subr.mxu0 0.0
        %670 = vmatpush1.msra.mxu0 0.0
        %671 = vmatprep.subr.mxu0 0.0
        %672 = vmatpush1.msra.mxu0 0.0
        %673 = vmatprep.subr.mxu0 0.0
        %674 = vmatpush1.msra.mxu0 %v304
        %675 = vmatprep.subr.mxu0 0.0
        %676 = vmatpush1.msra.mxu0 %v303
        %677 = vmatprep.subr.mxu0 0.0
        %678 = vmatpush1.msra.mxu0 %v302
        %679 = vmatprep.subr.mxu0 0.0
        %680 = vmatpush1.msra.mxu0 %v301
        %681 = vmatprep.subr.mxu0 0.0
        %682 = vmatpush2.msra.mxu0 0.0
        %683 = vmatprep.subr.mxu0 0.0
        %684 = vmatpush2.msra.mxu0 0.0
        %685 = vmatprep.subr.mxu0 0.0
        %686 = vmatpush2.msra.mxu0 0.0
        %687 = vmatprep.subr.mxu0 0.0
        %688 = vmatpush2.msra.mxu0 0.0
        %689 = vmatprep.subr.mxu0 0.0
        %690 = vmatpush2.msra.mxu0 0.0
        %691 = vmatprep.subr.mxu0 0.0
        %692 = vmatpush2.msra.mxu0 0.0
        %693 = vmatprep.subr.mxu0 0.0
        %694 = vmatpush2.msra.mxu0 0.0
        %695 = vmatprep.subr.mxu0 0.0
        %696 = vmatpush2.msra.mxu0 0.0
        %697 = vmatprep.subr.mxu0 0.0
        %698 = vmatpush2.msra.mxu0 0.0
        %699 = vmatprep.subr.mxu0 0.0
        %700 = vmatpush2.msra.mxu0 0.0
        %701 = vmatprep.subr.mxu0 0.0
        %702 = vmatpush2.msra.mxu0 0.0
        %703 = vmatprep.subr.mxu0 0.0
        %704 = vmatpush2.msra.mxu0 0.0
        %705 = vmatprep.subr.mxu0 0.0
        %706 = vmatpush2.msra.mxu0 0.0
        %707 = vmatprep.subr.mxu0 0.0
        %708 = vmatpush2.msra.mxu0 0.0
        %709 = vmatprep.subr.mxu0 0.0
        %710 = vmatpush2.msra.mxu0 0.0
        %711 = vmatprep.subr.mxu0 0.0
        %712 = vmatpush2.msra.mxu0 0.0
        %713 = vmatprep.mubr.f32.mxu0 0.0
        %714 = vmatmul.mubr.f32.gmra.mxu0 %v647
        %v715 = vpop.f32.mrf.mxu0
        %v716 = vadd.f32 0.0, %v715
        %v717 = vpop.f32.mrf.mxu0
        %718 = vdwg.mxu0
        %v719 = vadd.f32 %v646, %v716
        %v720 = vxor.u32 %v719, 2147483648
        %v721 = vmul.f32 %v720, 1.442695
        %v722 = vpow.pop %v721
        %v723 = vadd.f32 %v722, 1.0
        %v724 = vrcp.pop %v723
        %v725 = vmul.f32 1.0, %v724
        %v726 = vadd.f32 %v716, %v508
        %728 = vrot.lane.b32.xlu0 %v726, 64
        %v729 = vpop.permute.xlu0 %728
        %v731 = vmul.f32 %v725, %v729
        %733 = vrot.lane.b32.xlu0 %v731, 64
        %v734 = vpop.permute.xlu0 %733
        %v736 = vadd.f32 %v646, %v734
        %v737 = vtanh.pop %v736
        %v738 = vsub.f32 1.0, %v725
        %740 = vrot.lane.b32.xlu0 %v737, 96
        %v741 = vpop.permute.xlu0 %740
        %v743 = vmul.f32 %v738, %v741
        %v744 = vmul.f32 %v725, %v638
        %v745 = vadd.f32 %v743, %v744
        %747 = vrot.lane.b32.xlu0 %v745, 96
        %v748 = vpop.permute.xlu0 %747
        %s750 = scalar_lea.vmem %s288, 16 [#allocation10]
        %751 = vst.msk [vmem:[%s750] sm:$0xff] %vm322, %v748
        %s752 = scalar_lea.vmem [#allocation2], 24
        %v753 = vld [vmem:[%s752] sm:$0xff]
        %v754 = vsel %vm322, %v748, 0
        %756 = vmatprep.subr.mxu0 0.0
        %757 = vmatpush1.msra.mxu0 0.0
        %758 = vmatprep.subr.mxu0 0.0
        %759 = vmatpush1.msra.mxu0 0.0
        %760 = vmatprep.subr.mxu0 0.0
        %761 = vmatpush1.msra.mxu0 0.0
        %762 = vmatprep.subr.mxu0 0.0
        %763 = vmatpush1.msra.mxu0 0.0
        %764 = vmatprep.subr.mxu0 0.0
        %765 = vmatpush1.msra.mxu0 0.0
        %766 = vmatprep.subr.mxu0 0.0
        %767 = vmatpush1.msra.mxu0 0.0
        %768 = vmatprep.subr.mxu0 0.0
        %769 = vmatpush1.msra.mxu0 0.0
        %770 = vmatprep.subr.mxu0 0.0
        %771 = vmatpush1.msra.mxu0 0.0
        %772 = vmatprep.subr.mxu0 0.0
        %773 = vmatpush1.msra.mxu0 0.0
        %774 = vmatprep.subr.mxu0 0.0
        %775 = vmatpush1.msra.mxu0 0.0
        %776 = vmatprep.subr.mxu0 0.0
        %777 = vmatpush1.msra.mxu0 0.0
        %778 = vmatprep.subr.mxu0 0.0
        %779 = vmatpush1.msra.mxu0 0.0
        %780 = vmatprep.subr.mxu0 0.0
        %781 = vmatpush1.msra.mxu0 %v304
        %782 = vmatprep.subr.mxu0 0.0
        %783 = vmatpush1.msra.mxu0 %v303
        %784 = vmatprep.subr.mxu0 0.0
        %785 = vmatpush1.msra.mxu0 %v302
        %786 = vmatprep.subr.mxu0 0.0
        %787 = vmatpush1.msra.mxu0 %v301
        %788 = vmatprep.subr.mxu0 0.0
        %789 = vmatpush2.msra.mxu0 0.0
        %790 = vmatprep.subr.mxu0 0.0
        %791 = vmatpush2.msra.mxu0 0.0
        %792 = vmatprep.subr.mxu0 0.0
        %793 = vmatpush2.msra.mxu0 0.0
        %794 = vmatprep.subr.mxu0 0.0
        %795 = vmatpush2.msra.mxu0 0.0
        %796 = vmatprep.subr.mxu0 0.0
        %797 = vmatpush2.msra.mxu0 0.0
        %798 = vmatprep.subr.mxu0 0.0
        %799 = vmatpush2.msra.mxu0 0.0
        %800 = vmatprep.subr.mxu0 0.0
        %801 = vmatpush2.msra.mxu0 0.0
        %802 = vmatprep.subr.mxu0 0.0
        %803 = vmatpush2.msra.mxu0 0.0
        %804 = vmatprep.subr.mxu0 0.0
        %805 = vmatpush2.msra.mxu0 0.0
        %806 = vmatprep.subr.mxu0 0.0
        %807 = vmatpush2.msra.mxu0 0.0
        %808 = vmatprep.subr.mxu0 0.0
        %809 = vmatpush2.msra.mxu0 0.0
        %810 = vmatprep.subr.mxu0 0.0
        %811 = vmatpush2.msra.mxu0 0.0
        %812 = vmatprep.subr.mxu0 0.0
        %813 = vmatpush2.msra.mxu0 0.0
        %814 = vmatprep.subr.mxu0 0.0
        %815 = vmatpush2.msra.mxu0 0.0
        %816 = vmatprep.subr.mxu0 0.0
        %817 = vmatpush2.msra.mxu0 0.0
        %818 = vmatprep.subr.mxu0 0.0
        %819 = vmatpush2.msra.mxu0 0.0
        %820 = vmatprep.mubr.f32.mxu0 0.0
        %821 = vmatmul.mubr.f32.gmra.mxu0 %v754
        %v822 = vpop.f32.mrf.mxu0
        %v823 = vadd.f32 0.0, %v822
        %v824 = vpop.f32.mrf.mxu0
        %825 = vdwg.mxu0
        %v826 = vadd.f32 %v753, %v823
        %v827 = vxor.u32 %v826, 2147483648
        %v828 = vmul.f32 %v827, 1.442695
        %v829 = vpow.pop %v828
        %v830 = vadd.f32 %v829, 1.0
        %v831 = vrcp.pop %v830
        %v832 = vmul.f32 1.0, %v831
        %v833 = vadd.f32 %v823, %v508
        %835 = vrot.lane.b32.xlu0 %v833, 64
        %v836 = vpop.permute.xlu0 %835
        %v838 = vmul.f32 %v832, %v836
        %840 = vrot.lane.b32.xlu0 %v838, 64
        %v841 = vpop.permute.xlu0 %840
        %v843 = vadd.f32 %v753, %v841
        %v844 = vtanh.pop %v843
        %v845 = vsub.f32 1.0, %v832
        %847 = vrot.lane.b32.xlu0 %v844, 96
        %v848 = vpop.permute.xlu0 %847
        %v850 = vmul.f32 %v845, %v848
        %v851 = vmul.f32 %v832, %v745
        %v852 = vadd.f32 %v850, %v851
        %854 = vrot.lane.b32.xlu0 %v852, 96
        %v855 = vpop.permute.xlu0 %854
        %s857 = scalar_lea.vmem %s288, 24 [#allocation10]
        %858 = vst.msk [vmem:[%s857] sm:$0xff] %vm322, %v855
        %859 = vst.msk [vmem:[#allocation3] sm:$0xff] %vm322, %v855
        %s860 = sand.u32 %s157, 1
        %s861 = scalar_lea.sflag [#allocation6], %s860
        %s862 = sand.u32 %s157, 1
        %s863 = smul.addr %s862, 32
        %s864 = scalar_lea.vmem [#allocation10], %s863
        // Predicated region
        $region57: #{tpu_custom_call.1} parent=39 // pred_check
          %p865 = pneg %p167
        $region58: #{tpu_custom_call.1} parent=39 // pred_check_branch
          %867 = sbr.rel (%p865) target = $region60
        $region59: #{tpu_custom_call.1} parent=39 // pred_region
          %s868 = smul.u32 4, %s28
          %s870 = ssub.s32 512, 512
          %871 = vsyncadd %s861, %s870
          %s872 = sadd.s32 %s27, %s868
          %s873 = smul.addr %s872, 128
          %s874 = scalar_lea.hbm %s5, %s873
          %s875 = sshll.u32 %s864, 4
          %s876 = int_to_ptr.vmem [resolvable:$true] %s875
          %881 = dma.vmem_to_hbm [thread:$0]  %s876, 512, %s874, %s861, 128, 128, 8
        $region60: #{tpu_custom_call.1} parent=39 // pred_fallthru
          _
      $region40: #{tpu_custom_call.1} parent=5 // pred_fallthru
        _
      %p882 = scmp.le.s32.totalorder 2, %s18
      // Predicated region
      $region61: #{tpu_custom_call.1} parent=5 // pred_check
        %p883 = pneg %p882
      $region62: #{tpu_custom_call.1} parent=5 // pred_check_branch
        %885 = sbr.rel (%p883) target = $region64
      $region63: #{tpu_custom_call.1} parent=5 // pred_region
        %s886 = ssub.s32 %s18, 2
        // Predicated region
        $region65: #{tpu_custom_call.1} parent=63 // pred_check
          %p887 = pneg %p173
        $region66: #{tpu_custom_call.1} parent=63 // pred_check_branch
          %889 = sbr.rel (%p887) target = $region68
        $region67: #{tpu_custom_call.1} parent=63 // pred_region
          %s890 = sand.u32 %s158, 1
          %s891 = scalar_lea.sflag [#allocation6], %s890
          %s892 = sand.u32 %s158, 1
          %s893 = smul.addr %s892, 32
          %s894 = scalar_lea.vmem [#allocation10], %s893
          %895 = dma.done %s891, 512
        $region68: #{tpu_custom_call.1} parent=63 // pred_fallthru
          _
      $region64: #{tpu_custom_call.1} parent=5 // pred_fallthru
        _
    $region6: #{tpu_custom_call.1} parent=1 // loop_footer
      %s22 = sadd.s32 1, %s18
    $region7: #{tpu_custom_call.1} parent=1 // loop_footer_branch
      %17 = sbr.rel target = $region3
    $region8: #{tpu_custom_call.1} parent=1 // loop_exit
      _
    %896 = vsyncpa [#allocation5], 1
    %s897 = scalar_lea.sflag [#allocation5], 1
    %898 = vsyncpa %s897, 1
    %899 = vsyncpa [#allocation8], 1
    %900 = vsyncpa [#allocation6], 1
    %s901 = scalar_lea.sflag [#allocation6], 1
    %902 = vsyncpa %s901, 1

</llo_original>
